<compile_context>
chip_gen: v7x
topology: tpu7x:2x2x1
jax: 0.10.0
libtpu: 0.0.40
codegen_flags: <defaults>
</compile_context>

<pallas_src>
import jax
import jax.numpy as jnp
from jax.experimental import pallas as pl
from jax.experimental.pallas import tpu as pltpu

LANE = 128
HIDDEN = (64, 32, 16)


def _round_up(n, m):
    return ((n + m - 1) // m) * m


def mlp_kernel(x_ref, w1_ref, b1_ref, w2_ref, b2_ref,
               w3_ref, b3_ref, w4_ref, b4_ref, o_ref):
    # Cast x to the weight (compute) dtype inside the kernel -- no HBM copy.
    x = x_ref[...].astype(w1_ref.dtype)

    # Layer 1: Linear(in_dims, 64 padded to 128) + ReLU  (MXU, f32 accumulate)
    h = jnp.dot(x, w1_ref[...], preferred_element_type=jnp.float32) + b1_ref[...]
    h = jnp.maximum(h, 0.0).astype(w2_ref.dtype)

    # Layer 2: Linear(64, 32) + ReLU (padded to 128x128)
    h = jnp.dot(h, w2_ref[...], preferred_element_type=jnp.float32) + b2_ref[...]
    h = jnp.maximum(h, 0.0).astype(w3_ref.dtype)

    # Layer 3: Linear(32, 16) + ReLU (padded to 128x128)
    h = jnp.dot(h, w3_ref[...], preferred_element_type=jnp.float32) + b3_ref[...]
    h = jnp.maximum(h, 0.0).astype(w4_ref.dtype)

    # Layer 4: Linear(16, out_dims) -- output lanes UNPADDED
    y = jnp.dot(h, w4_ref[...], preferred_element_type=jnp.float32) + b4_ref[...]
    o_ref[...] = y.astype(o_ref.dtype)


def prepare_params(params, compute_dtype=jnp.float32):
    """Pad hidden dims to 128 lanes and cast ONCE, outside the per-call wrapper.

    w1 keeps its unpadded row dim (== in_dims); w4 keeps its unpadded output
    columns (== out_dims). Biases stay f32 (bias add / ReLU run in f32).
    bf16 compute_dtype is fine on v5e/v6e/v7x (accumulation stays f32).
    """
    in_dims = params["w1"].shape[0]
    out_dims = params["w4"].shape[1]
    h1p, h2p, h3p = (_round_up(h, LANE) for h in HIDDEN)

    def pad_w(w, rows_p, cols_p):
        r, c = w.shape
        return jnp.pad(w, ((0, rows_p - r), (0, cols_p - c))).astype(compute_dtype)

    def pad_b(b, cols_p):
        return jnp.pad(b, ((0, 0), (0, cols_p - b.shape[1]))).astype(jnp.float32)

    return {
        "w1": pad_w(params["w1"], in_dims, h1p), "b1": pad_b(params["b1"], h1p),
        "w2": pad_w(params["w2"], h1p, h2p),     "b2": pad_b(params["b2"], h2p),
        "w3": pad_w(params["w3"], h2p, h3p),     "b3": pad_b(params["b3"], h3p),
        "w4": pad_w(params["w4"], h3p, out_dims), "b4": pad_b(params["b4"], out_dims),
    }


def simple_mlp_forward(x, prepared, *, tb=2048):
    """x: [batch, in_dims]. prepared: dict from prepare_params(). Output dtype == x.dtype."""
    w1, b1 = prepared["w1"], prepared["b1"]
    w2, b2 = prepared["w2"], prepared["b2"]
    w3, b3 = prepared["w3"], prepared["b3"]
    w4, b4 = prepared["w4"], prepared["b4"]

    batch, in_dims = x.shape
    assert in_dims == w1.shape[0], "x feature dim does not match prepared w1"
    out_dims = w4.shape[1]
    out_dtype = x.dtype

    # Batch: pad only to the sublane multiple (16 for packed bf16 operands).
    sub = 16 if w1.dtype == jnp.bfloat16 else 8
    batch_p = _round_up(batch, sub)
    if batch_p != batch:
        x = jnp.pad(x, ((0, batch_p - batch), (0, 0)))

    # Batch tile: large enough to amortize the ~0.35 us per-step overhead, but
    # keep >= 2 grid steps when the batch allows (v7x megacore). Pallas handles
    # the partial edge block when tb does not divide batch_p.
    tb = max(sub, min(_round_up(tb, sub), _round_up(pl.cdiv(batch_p, 2), sub)))
    grid = (pl.cdiv(batch_p, tb),)

    def resident(arr):
        # Weights/biases: same block every step -> DMA'd once, VMEM-resident.
        nd = arr.ndim
        return pl.BlockSpec(arr.shape, lambda i, _n=nd: (0,) * _n)

    param_bytes = sum(int(a.size) * a.dtype.itemsize
                      for a in (w1, b1, w2, b2, w3, b3, w4, b4))

    # Real (unpadded) flops/bytes so XLA schedules around the call sensibly.
    flops = 2 * batch * (in_dims * 64 + 64 * 32 + 32 * 16 + 16 * out_dims)
    bytes_accessed = (batch * in_dims * x.dtype.itemsize
                      + batch * out_dims * jnp.dtype(out_dtype).itemsize
                      + param_bytes)
    cost = pl.CostEstimate(flops=flops, transcendentals=0,
                           bytes_accessed=bytes_accessed)

    # VMEM footprint: double-buffered x/out blocks + f32 activation temporaries
    # + resident params. Sized so big tiles still compile under v5e's 16 MiB
    # scoped default; capped well below v7x's 64 MiB physical VMEM.
    est = (2 * tb * in_dims * x.dtype.itemsize
           + 2 * tb * out_dims * jnp.dtype(out_dtype).itemsize
           + 6 * tb * LANE * 4
           + 2 * param_bytes)
    vmem_limit = int(min(48 << 20, max(16 << 20, 2 * est)))

    out = pl.pallas_call(
        mlp_kernel,
        out_shape=jax.ShapeDtypeStruct((batch_p, out_dims), out_dtype),
        grid=grid,
        in_specs=[
            pl.BlockSpec((tb, in_dims), lambda i: (i, 0)),   # x: tiled on batch, unpadded lanes
            resident(w1), resident(b1),
            resident(w2), resident(b2),
            resident(w3), resident(b3),
            resident(w4), resident(b4),
        ],
        out_specs=pl.BlockSpec((tb, out_dims), lambda i: (i, 0)),  # unpadded output lanes
        compiler_params=pltpu.CompilerParams(
            dimension_semantics=("parallel",),   # v7x: spread batch tiles over 2 TCs
            vmem_limit_bytes=vmem_limit,
        ),
        cost_estimate=cost,
    )(x, w1, b1, w2, b2, w3, b3, w4, b4)

    return out if batch_p == batch else out[:batch]


def init_params(key, in_dims, out_dims):
    """Synthetic init mirroring torch.nn.Linear shapes (stored transposed: [in, out])."""
    dims = [in_dims, 64, 32, 16, out_dims]
    params = {}
    keys = jax.random.split(key, 2 * (len(dims) - 1))
    for i in range(len(dims) - 1):
        fan_in, fan_out = dims[i], dims[i + 1]
        bound = 1.0 / jnp.sqrt(fan_in)
        params[f"w{i + 1}"] = jax.random.uniform(
            keys[2 * i], (fan_in, fan_out), minval=-bound, maxval=bound,
            dtype=jnp.float32)
        params[f"b{i + 1}"] = jax.random.uniform(
            keys[2 * i + 1], (1, fan_out), minval=-bound, maxval=bound,
            dtype=jnp.float32)
    return params


def reference_forward(x, params):
    h = jnp.maximum(x @ params["w1"] + params["b1"], 0.0)
    h = jnp.maximum(h @ params["w2"] + params["b2"], 0.0)
    h = jnp.maximum(h @ params["w3"] + params["b3"], 0.0)
    return h @ params["w4"] + params["b4"]


if __name__ == "__main__":
    key = jax.random.PRNGKey(0)
    k_x, k_p, k_x2 = jax.random.split(key, 3)

    batch, in_dims, out_dims = 8, 32, 8
    x = jax.random.normal(k_x, (batch, in_dims), dtype=jnp.float32)
    params = init_params(k_p, in_dims, out_dims)
    ref = reference_forward(x, params)

    # f32-operand path: exact (modulo f32 rounding) vs the pure-JAX reference.
    prep_f32 = prepare_params(params, jnp.float32)
    out_f32 = jax.block_until_ready(simple_mlp_forward(x, prep_f32))
    assert out_f32.shape == (batch, out_dims)
    assert jnp.allclose(out_f32, ref, atol=1e-4, rtol=1e-4)

    # bf16-operand path (valid on v5e/v6e/v7x; f32 accumulation) -> loose tolerance.
    prep_bf16 = prepare_params(params, jnp.bfloat16)
    out_bf16 = jax.block_until_ready(simple_mlp_forward(x, prep_bf16))
    assert out_bf16.shape == (batch, out_dims)
    assert jnp.allclose(out_bf16.astype(jnp.float32), ref, atol=2e-1, rtol=5e-2)

    # Non-multiple-of-8 batch: exercises sublane pad, multi-step grid and the
    # partial edge block.
    x2 = jax.random.normal(k_x2, (50, in_dims), dtype=jnp.float32)
    ref2 = reference_forward(x2, params)
    out2 = jax.block_until_ready(simple_mlp_forward(x2, prep_f32, tb=32))
    assert out2.shape == (50, out_dims)
    assert jnp.allclose(out2, ref2, atol=1e-4, rtol=1e-4)

    print("KERNEL_OK")
</pallas_src>

<mosaic_0001>
module attributes {stable_mosaic.version = 11 : i64} {
  func.func @mlp_kernel(%arg0: i32, %arg1: memref<8x32xf32, #tpu.memory_space<vmem>>, %arg2: memref<32x128xf32, #tpu.memory_space<vmem>>, %arg3: memref<1x128xf32, #tpu.memory_space<vmem>>, %arg4: memref<128x128xf32, #tpu.memory_space<vmem>>, %arg5: memref<1x128xf32, #tpu.memory_space<vmem>>, %arg6: memref<128x128xf32, #tpu.memory_space<vmem>>, %arg7: memref<1x128xf32, #tpu.memory_space<vmem>>, %arg8: memref<128x8xf32, #tpu.memory_space<vmem>>, %arg9: memref<1x8xf32, #tpu.memory_space<vmem>>, %arg10: memref<8x8xf32, #tpu.memory_space<vmem>>) attributes {dimension_semantics = [#tpu.dimension_semantics<parallel>], iteration_bounds = array<i64: 1>, scalar_prefetch = 0 : i64, scratch_operands = 0 : i64, tpu.core_type = #tpu.core_type<tc>, window_params = [{transform_indices = @transform_0, window_bounds = array<i64: 8, 32>}, {pipeline_mode = #tpu.pipeline_mode<synchronous>, transform_indices = @transform_1, window_bounds = array<i64: 32, 128>}, {pipeline_mode = #tpu.pipeline_mode<synchronous>, transform_indices = @transform_2, window_bounds = array<i64: 1, 128>}, {pipeline_mode = #tpu.pipeline_mode<synchronous>, transform_indices = @transform_3, window_bounds = array<i64: 128, 128>}, {pipeline_mode = #tpu.pipeline_mode<synchronous>, transform_indices = @transform_4, window_bounds = array<i64: 1, 128>}, {pipeline_mode = #tpu.pipeline_mode<synchronous>, transform_indices = @transform_5, window_bounds = array<i64: 128, 128>}, {pipeline_mode = #tpu.pipeline_mode<synchronous>, transform_indices = @transform_6, window_bounds = array<i64: 1, 128>}, {pipeline_mode = #tpu.pipeline_mode<synchronous>, transform_indices = @transform_7, window_bounds = array<i64: 128, 8>}, {pipeline_mode = #tpu.pipeline_mode<synchronous>, transform_indices = @transform_8, window_bounds = array<i64: 1, 8>}, {transform_indices = @transform_9, window_bounds = array<i64: 8, 8>}]} {
    %c0 = arith.constant 0 : index
    %c0_0 = arith.constant 0 : index
    %0 = vector.load %arg1[%c0, %c0_0] : memref<8x32xf32, #tpu.memory_space<vmem>>, vector<8x32xf32>
    %c0_1 = arith.constant 0 : index
    %c0_2 = arith.constant 0 : index
    %1 = vector.load %arg2[%c0_1, %c0_2] : memref<32x128xf32, #tpu.memory_space<vmem>>, vector<32x128xf32>
    %cst = arith.constant dense<0.000000e+00> : vector<8x128xf32>
    %2 = tpu.matmul %0, %1, %cst {dimension_numbers = #tpu.dot_dimension_numbers<[1], [0], [0], [1], [0, 0, 1, 1], [], []>} : vector<8x32xf32>, vector<32x128xf32>, vector<8x128xf32> -> vector<8x128xf32>
    %c0_3 = arith.constant 0 : index
    %c0_4 = arith.constant 0 : index
    %3 = vector.load %arg3[%c0_3, %c0_4] : memref<1x128xf32, #tpu.memory_space<vmem>>, vector<1x128xf32>
    %4 = vector.broadcast %3 : vector<1x128xf32> to vector<8x128xf32>
    %5 = arith.addf %2, %4 : vector<8x128xf32>
    %cst_5 = arith.constant 0.000000e+00 : f32
    %6 = vector.broadcast %cst_5 : f32 to vector<8x128xf32>
    %7 = arith.maximumf %5, %6 : vector<8x128xf32>
    %c0_6 = arith.constant 0 : index
    %c0_7 = arith.constant 0 : index
    %8 = vector.load %arg4[%c0_6, %c0_7] : memref<128x128xf32, #tpu.memory_space<vmem>>, vector<128x128xf32>
    %cst_8 = arith.constant dense<0.000000e+00> : vector<8x128xf32>
    %9 = tpu.matmul %7, %8, %cst_8 {dimension_numbers = #tpu.dot_dimension_numbers<[1], [0], [0], [1], [0, 0, 1, 1], [], []>} : vector<8x128xf32>, vector<128x128xf32>, vector<8x128xf32> -> vector<8x128xf32>
    %c0_9 = arith.constant 0 : index
    %c0_10 = arith.constant 0 : index
    %10 = vector.load %arg5[%c0_9, %c0_10] : memref<1x128xf32, #tpu.memory_space<vmem>>, vector<1x128xf32>
    %11 = vector.broadcast %10 : vector<1x128xf32> to vector<8x128xf32>
    %12 = arith.addf %9, %11 : vector<8x128xf32>
    %cst_11 = arith.constant 0.000000e+00 : f32
    %13 = vector.broadcast %cst_11 : f32 to vector<8x128xf32>
    %14 = arith.maximumf %12, %13 : vector<8x128xf32>
    %c0_12 = arith.constant 0 : index
    %c0_13 = arith.constant 0 : index
    %15 = vector.load %arg6[%c0_12, %c0_13] : memref<128x128xf32, #tpu.memory_space<vmem>>, vector<128x128xf32>
    %cst_14 = arith.constant dense<0.000000e+00> : vector<8x128xf32>
    %16 = tpu.matmul %14, %15, %cst_14 {dimension_numbers = #tpu.dot_dimension_numbers<[1], [0], [0], [1], [0, 0, 1, 1], [], []>} : vector<8x128xf32>, vector<128x128xf32>, vector<8x128xf32> -> vector<8x128xf32>
    %c0_15 = arith.constant 0 : index
    %c0_16 = arith.constant 0 : index
    %17 = vector.load %arg7[%c0_15, %c0_16] : memref<1x128xf32, #tpu.memory_space<vmem>>, vector<1x128xf32>
    %18 = vector.broadcast %17 : vector<1x128xf32> to vector<8x128xf32>
    %19 = arith.addf %16, %18 : vector<8x128xf32>
    %cst_17 = arith.constant 0.000000e+00 : f32
    %20 = vector.broadcast %cst_17 : f32 to vector<8x128xf32>
    %21 = arith.maximumf %19, %20 : vector<8x128xf32>
    %c0_18 = arith.constant 0 : index
    %c0_19 = arith.constant 0 : index
    %22 = vector.load %arg8[%c0_18, %c0_19] : memref<128x8xf32, #tpu.memory_space<vmem>>, vector<128x8xf32>
    %cst_20 = arith.constant dense<0.000000e+00> : vector<8x8xf32>
    %23 = tpu.matmul %21, %22, %cst_20 {dimension_numbers = #tpu.dot_dimension_numbers<[1], [0], [0], [1], [0, 0, 1, 1], [], []>} : vector<8x128xf32>, vector<128x8xf32>, vector<8x8xf32> -> vector<8x8xf32>
    %c0_21 = arith.constant 0 : index
    %c0_22 = arith.constant 0 : index
    %24 = vector.load %arg9[%c0_21, %c0_22] : memref<1x8xf32, #tpu.memory_space<vmem>>, vector<1x8xf32>
    %25 = vector.broadcast %24 : vector<1x8xf32> to vector<8x8xf32>
    %26 = arith.addf %23, %25 : vector<8x8xf32>
    %c0_23 = arith.constant 0 : index
    %c0_24 = arith.constant 0 : index
    %27 = vector.load %arg10[%c0_23, %c0_24] : memref<8x8xf32, #tpu.memory_space<vmem>>, vector<8x8xf32>
    tpu.vector_store %arg10[%c0_23, %c0_24], %26 {strides = array<i32>} : memref<8x8xf32, #tpu.memory_space<vmem>>, vector<8x8xf32>,
    return
  }
  func.func @transform_0(%arg0: i32) -> (i32, i32) {
    %c0_i32 = arith.constant 0 : i32
    %c0_i32_0 = arith.constant 0 : i32
    return %arg0, %c0_i32 : i32, i32
  }
  func.func @transform_1(%arg0: i32) -> (i32, i32) {
    %c0_i32 = arith.constant 0 : i32
    %c0_i32_0 = arith.constant 0 : i32
    %c0_i32_1 = arith.constant 0 : i32
    return %c0_i32, %c0_i32_0 : i32, i32
  }
  func.func @transform_2(%arg0: i32) -> (i32, i32) {
    %c0_i32 = arith.constant 0 : i32
    %c0_i32_0 = arith.constant 0 : i32
    %c0_i32_1 = arith.constant 0 : i32
    return %c0_i32, %c0_i32_0 : i32, i32
  }
  func.func @transform_3(%arg0: i32) -> (i32, i32) {
    %c0_i32 = arith.constant 0 : i32
    %c0_i32_0 = arith.constant 0 : i32
    %c0_i32_1 = arith.constant 0 : i32
    return %c0_i32, %c0_i32_0 : i32, i32
  }
  func.func @transform_4(%arg0: i32) -> (i32, i32) {
    %c0_i32 = arith.constant 0 : i32
    %c0_i32_0 = arith.constant 0 : i32
    %c0_i32_1 = arith.constant 0 : i32
    return %c0_i32, %c0_i32_0 : i32, i32
  }
  func.func @transform_5(%arg0: i32) -> (i32, i32) {
    %c0_i32 = arith.constant 0 : i32
    %c0_i32_0 = arith.constant 0 : i32
    %c0_i32_1 = arith.constant 0 : i32
    return %c0_i32, %c0_i32_0 : i32, i32
  }
  func.func @transform_6(%arg0: i32) -> (i32, i32) {
    %c0_i32 = arith.constant 0 : i32
    %c0_i32_0 = arith.constant 0 : i32
    %c0_i32_1 = arith.constant 0 : i32
    return %c0_i32, %c0_i32_0 : i32, i32
  }
  func.func @transform_7(%arg0: i32) -> (i32, i32) {
    %c0_i32 = arith.constant 0 : i32
    %c0_i32_0 = arith.constant 0 : i32
    %c0_i32_1 = arith.constant 0 : i32
    return %c0_i32, %c0_i32_0 : i32, i32
  }
  func.func @transform_8(%arg0: i32) -> (i32, i32) {
    %c0_i32 = arith.constant 0 : i32
    %c0_i32_0 = arith.constant 0 : i32
    %c0_i32_1 = arith.constant 0 : i32
    return %c0_i32, %c0_i32_0 : i32, i32
  }
  func.func @transform_9(%arg0: i32) -> (i32, i32) {
    %c0_i32 = arith.constant 0 : i32
    %c0_i32_0 = arith.constant 0 : i32
    return %arg0, %c0_i32 : i32, i32
  }
}

</mosaic_0001>

<llo_original>
// kernel: tpu_custom_call.1
$region0: #{tpu_custom_call.1}
  #allocation0 [shape = 'u32[]', space=smem, size = 0x4, offset = 0x4, fixed_abs, tag = 'smem constant byte address 0x4 - core index']
  #allocation1 [shape = 'u32[144,128]{1,0:T(1,128)}', space=vmem, size = 0x12000, scoped, tag = 'internal scratch']
  %s0 = inlined_call_operand.vmem [shape: f32[8,32], index: 0, kind: input, shape index: {}]
  %s1 = inlined_call_operand.hbm [shape: f32[32,128], index: 1, kind: input, shape index: {}]
  %s2 = inlined_call_operand.vmem [shape: f32[1,128], index: 2, kind: input, shape index: {}]
  %s3 = inlined_call_operand.vmem [shape: f32[128,128], index: 3, kind: input, shape index: {}]
  %s4 = inlined_call_operand.vmem [shape: f32[1,128], index: 4, kind: input, shape index: {}]
  %s5 = inlined_call_operand.hbm [shape: f32[128,128], index: 5, kind: input, shape index: {}]
  %s6 = inlined_call_operand.vmem [shape: f32[1,128], index: 6, kind: input, shape index: {}]
  %s7 = inlined_call_operand.vmem [shape: f32[128,8], index: 7, kind: input, shape index: {}]
  %s8 = inlined_call_operand.vmem [shape: f32[1,8], index: 8, kind: input, shape index: {}]
  %s9 = inlined_call_operand.hbm [shape: f32[8,8], index: 9, kind: output, shape index: {}]
  %s10 = sld [smem:[#allocation0]]
  $region54: #{tpu_custom_call.1} parent=0
    _
  %s12 = ssub.s32 1, %s10
  %s13 = scalar_select 0, %s12, %s10
  $region1: #{tpu_custom_call.1} parent=0
    #allocation2 [shape = 'u8[16384]{0}', space=vmem, size = 0x4000, scoped, tag = 'input window, operand 1, single buffered']
    #allocation3 [shape = 's32[1]{0}', space=sflag, size = 0x4, scoped, tag = 'scoped memory for tpu_custom_call.1']
    #allocation4 [shape = 's32[1]{0}', space=sflag, size = 0x4, scoped, tag = 'scoped memory for tpu_custom_call.1']
    #allocation5 [shape = 'u8[65536]{0}', space=vmem, size = 0x10000, scoped, tag = 'input window, operand 5, single buffered']
    #allocation6 [shape = 's32[1]{0}', space=sflag, size = 0x4, scoped, tag = 'scoped memory for tpu_custom_call.1']
    #allocation7 [shape = 'u8[4096]{0}', space=vmem, size = 0x1000, scoped, tag = 'output window, operand 0, single buffered']
    %14 = vsyncpa [#allocation3], 0
    %15 = vsyncpa [#allocation6], 0
    %16 = vsyncpa [#allocation4], 0
    // Predicated region
    $region2: #{tpu_custom_call.1} parent=1 // pred_check
      _
    $region3: #{tpu_custom_call.1} parent=1 // pred_check_branch
      %18 = sbr.rel (0) target = $region5
    $region4: #{tpu_custom_call.1} parent=1 // pred_region
      _
    $region5: #{tpu_custom_call.1} parent=1 // pred_fallthru
      _
    // Predicated region
    $region6: #{tpu_custom_call.1} parent=1 // pred_check
      _
    $region7: #{tpu_custom_call.1} parent=1 // pred_check_branch
      %20 = sbr.rel (0) target = $region9
    $region8: #{tpu_custom_call.1} parent=1 // pred_region
      %s22 = ssub.s32 512, 512
      %23 = vsyncadd [#allocation3], %s22
      %s24 = sshll.u32 [#allocation2], 4
      %s25 = int_to_ptr.vmem [resolvable:$true] %s24
      %30 = dma.hbm_to_vmem [thread:$0]  %s1, 512, %s25, [#allocation3], 128, 128, 8
    $region9: #{tpu_custom_call.1} parent=1 // pred_fallthru
      _
    // Predicated region
    $region10: #{tpu_custom_call.1} parent=1 // pred_check
      _
    $region11: #{tpu_custom_call.1} parent=1 // pred_check_branch
      %32 = sbr.rel (0) target = $region13
    $region12: #{tpu_custom_call.1} parent=1 // pred_region
      _
    $region13: #{tpu_custom_call.1} parent=1 // pred_fallthru
      _
    // Predicated region
    $region14: #{tpu_custom_call.1} parent=1 // pred_check
      _
    $region15: #{tpu_custom_call.1} parent=1 // pred_check_branch
      %34 = sbr.rel (0) target = $region17
    $region16: #{tpu_custom_call.1} parent=1 // pred_region
      _
    $region17: #{tpu_custom_call.1} parent=1 // pred_fallthru
      _
    // Predicated region
    $region18: #{tpu_custom_call.1} parent=1 // pred_check
      _
    $region19: #{tpu_custom_call.1} parent=1 // pred_check_branch
      %36 = sbr.rel (0) target = $region21
    $region20: #{tpu_custom_call.1} parent=1 // pred_region
      _
    $region21: #{tpu_custom_call.1} parent=1 // pred_fallthru
      _
    // Predicated region
    $region22: #{tpu_custom_call.1} parent=1 // pred_check
      _
    $region23: #{tpu_custom_call.1} parent=1 // pred_check_branch
      %38 = sbr.rel (0) target = $region25
    $region24: #{tpu_custom_call.1} parent=1 // pred_region
      %s40 = ssub.s32 2048, 2048
      %41 = vsyncadd [#allocation6], %s40
      %s42 = sshll.u32 [#allocation5], 4
      %s43 = int_to_ptr.vmem [resolvable:$true] %s42
      %48 = dma.hbm_to_vmem [thread:$0]  %s5, 2048, %s43, [#allocation6], 128, 128, 8
    $region25: #{tpu_custom_call.1} parent=1 // pred_fallthru
      _
    // Predicated region
    $region26: #{tpu_custom_call.1} parent=1 // pred_check
      _
    $region27: #{tpu_custom_call.1} parent=1 // pred_check_branch
      %50 = sbr.rel (0) target = $region29
    $region28: #{tpu_custom_call.1} parent=1 // pred_region
      _
    $region29: #{tpu_custom_call.1} parent=1 // pred_fallthru
      _
    // Predicated region
    $region30: #{tpu_custom_call.1} parent=1 // pred_check
      _
    $region31: #{tpu_custom_call.1} parent=1 // pred_check_branch
      %52 = sbr.rel (0) target = $region33
    $region32: #{tpu_custom_call.1} parent=1 // pred_region
      _
    $region33: #{tpu_custom_call.1} parent=1 // pred_fallthru
      _
    // Predicated region
    $region34: #{tpu_custom_call.1} parent=1 // pred_check
      _
    $region35: #{tpu_custom_call.1} parent=1 // pred_check_branch
      %54 = sbr.rel (0) target = $region37
    $region36: #{tpu_custom_call.1} parent=1 // pred_region
      _
    $region37: #{tpu_custom_call.1} parent=1 // pred_fallthru
      _
    // Predicated region
    $region38: #{tpu_custom_call.1} parent=1 // pred_check
      _
    $region39: #{tpu_custom_call.1} parent=1 // pred_check_branch
      %56 = sbr.rel (0) target = $region41
    $region40: #{tpu_custom_call.1} parent=1 // pred_region
      %57 = dma.done [#allocation3], 512
    $region41: #{tpu_custom_call.1} parent=1 // pred_fallthru
      _
    // Predicated region
    $region42: #{tpu_custom_call.1} parent=1 // pred_check
      _
    $region43: #{tpu_custom_call.1} parent=1 // pred_check_branch
      %59 = sbr.rel (0) target = $region45
    $region44: #{tpu_custom_call.1} parent=1 // pred_region
      %60 = dma.done [#allocation6], 2048
    $region45: #{tpu_custom_call.1} parent=1 // pred_fallthru
      _
    %v61 = vld [vmem:[%s0] sm:$0xff]
    %v62 = vld [vmem:[#allocation2] sm:$0xff]
    %v63 = vld [vmem:[#allocation2 + $0x8] sm:$0xff]
    %v64 = vld [vmem:[#allocation2 + $0x10] sm:$0xff]
    %v65 = vld [vmem:[#allocation2 + $0x18] sm:$0xff]
    %v66 = vld [vmem:[%s2] sm:$0x1]
    %v68 = vlaneseq
    %v69 = vshrl.u32 %v68, 7
    %v70 = vsub.s32 0, %v69
    %v71 = vrot.slane %v66, %v70
    %vm73 = vcmask 261120
    %v75 = vsel %vm73, %v61, 0
    %77 = vmatprep.subr.mxu0 0.0
    %78 = vmatpush1.msra.mxu0 %v62
    %79 = vmatprep.subr.mxu0 0.0
    %80 = vmatpush1.msra.mxu0 %v63
    %81 = vmatprep.subr.mxu0 0.0
    %82 = vmatpush1.msra.mxu0 %v64
    %83 = vmatprep.subr.mxu0 0.0
    %84 = vmatpush1.msra.mxu0 %v65
    %85 = vmatprep.subr.mxu0 0.0
    %86 = vmatpush1.msra.mxu0 0.0
    %87 = vmatprep.subr.mxu0 0.0
    %88 = vmatpush1.msra.mxu0 0.0
    %89 = vmatprep.subr.mxu0 0.0
    %90 = vmatpush1.msra.mxu0 0.0
    %91 = vmatprep.subr.mxu0 0.0
    %92 = vmatpush1.msra.mxu0 0.0
    %93 = vmatprep.subr.mxu0 0.0
    %94 = vmatpush1.msra.mxu0 0.0
    %95 = vmatprep.subr.mxu0 0.0
    %96 = vmatpush1.msra.mxu0 0.0
    %97 = vmatprep.subr.mxu0 0.0
    %98 = vmatpush1.msra.mxu0 0.0
    %99 = vmatprep.subr.mxu0 0.0
    %100 = vmatpush1.msra.mxu0 0.0
    %101 = vmatprep.subr.mxu0 0.0
    %102 = vmatpush1.msra.mxu0 0.0
    %103 = vmatprep.subr.mxu0 0.0
    %104 = vmatpush1.msra.mxu0 0.0
    %105 = vmatprep.subr.mxu0 0.0
    %106 = vmatpush1.msra.mxu0 0.0
    %107 = vmatprep.subr.mxu0 0.0
    %108 = vmatpush1.msra.mxu0 0.0
    %109 = vmatprep.subr.mxu0 0.0
    %110 = vmatpush1.msra.mxu0 0.0
    %111 = vmatprep.subr.mxu0 0.0
    %112 = vmatpush1.msra.mxu0 0.0
    %113 = vmatprep.subr.mxu0 0.0
    %114 = vmatpush1.msra.mxu0 0.0
    %115 = vmatprep.subr.mxu0 0.0
    %116 = vmatpush1.msra.mxu0 0.0
    %117 = vmatprep.subr.mxu0 0.0
    %118 = vmatpush1.msra.mxu0 0.0
    %119 = vmatprep.subr.mxu0 0.0
    %120 = vmatpush1.msra.mxu0 0.0
    %121 = vmatprep.subr.mxu0 0.0
    %122 = vmatpush1.msra.mxu0 0.0
    %123 = vmatprep.subr.mxu0 0.0
    %124 = vmatpush1.msra.mxu0 0.0
    %125 = vmatprep.subr.mxu0 0.0
    %126 = vmatpush1.msra.mxu0 0.0
    %127 = vmatprep.subr.mxu0 0.0
    %128 = vmatpush1.msra.mxu0 0.0
    %129 = vmatprep.subr.mxu0 0.0
    %130 = vmatpush1.msra.mxu0 0.0
    %131 = vmatprep.subr.mxu0 0.0
    %132 = vmatpush1.msra.mxu0 0.0
    %133 = vmatprep.subr.mxu0 0.0
    %134 = vmatpush1.msra.mxu0 0.0
    %135 = vmatprep.subr.mxu0 0.0
    %136 = vmatpush1.msra.mxu0 0.0
    %137 = vmatprep.subr.mxu0 0.0
    %138 = vmatpush1.msra.mxu0 0.0
    %139 = vmatprep.subr.mxu0 0.0
    %140 = vmatpush1.msra.mxu0 0.0
    %141 = vmatprep.mubr.f32.mxu0 0.0
    %142 = vmatmul.mubr.f32.gmra.mrb[0].mxu0 %v75
    %v143 = vpop.f32.mrb[0].mxu0
    %v144 = vadd.f32 %v71, %v143
    %v145 = vpop.f32.mrb[0].mxu0
    %146 = vdwg.mxu0
    %v147 = vmax.f32 %v144, 0.0
    %v148 = vld [vmem:[%s3] sm:$0xff]
    %v149 = vld [vmem:[%s3 + $0x8] sm:$0xff]
    %v150 = vld [vmem:[%s3 + $0x10] sm:$0xff]
    %v151 = vld [vmem:[%s3 + $0x18] sm:$0xff]
    %v152 = vld [vmem:[%s3 + $0x20] sm:$0xff]
    %v153 = vld [vmem:[%s3 + $0x28] sm:$0xff]
    %v154 = vld [vmem:[%s3 + $0x30] sm:$0xff]
    %v155 = vld [vmem:[%s3 + $0x38] sm:$0xff]
    %v156 = vld [vmem:[%s3 + $0x40] sm:$0xff]
    %v157 = vld [vmem:[%s3 + $0x48] sm:$0xff]
    %v158 = vld [vmem:[%s3 + $0x50] sm:$0xff]
    %v159 = vld [vmem:[%s3 + $0x58] sm:$0xff]
    %v160 = vld [vmem:[%s3 + $0x60] sm:$0xff]
    %v161 = vld [vmem:[%s3 + $0x68] sm:$0xff]
    %v162 = vld [vmem:[%s3 + $0x70] sm:$0xff]
    %v163 = vld [vmem:[%s3 + $0x78] sm:$0xff]
    %v164 = vld [vmem:[%s4] sm:$0x1]
    %v166 = vlaneseq
    %v167 = vshrl.u32 %v166, 7
    %v168 = vsub.s32 0, %v167
    %v169 = vrot.slane %v164, %v168
    %171 = vmatprep.subr.mxu0 0.0
    %172 = vmatpush1.msra.mxu0 %v148
    %173 = vmatprep.subr.mxu0 0.0
    %174 = vmatpush1.msra.mxu0 %v149
    %175 = vmatprep.subr.mxu0 0.0
    %176 = vmatpush1.msra.mxu0 %v150
    %177 = vmatprep.subr.mxu0 0.0
    %178 = vmatpush1.msra.mxu0 %v151
    %179 = vmatprep.subr.mxu0 0.0
    %180 = vmatpush1.msra.mxu0 %v152
    %181 = vmatprep.subr.mxu0 0.0
    %182 = vmatpush1.msra.mxu0 %v153
    %183 = vmatprep.subr.mxu0 0.0
    %184 = vmatpush1.msra.mxu0 %v154
    %185 = vmatprep.subr.mxu0 0.0
    %186 = vmatpush1.msra.mxu0 %v155
    %187 = vmatprep.subr.mxu0 0.0
    %188 = vmatpush1.msra.mxu0 %v156
    %189 = vmatprep.subr.mxu0 0.0
    %190 = vmatpush1.msra.mxu0 %v157
    %191 = vmatprep.subr.mxu0 0.0
    %192 = vmatpush1.msra.mxu0 %v158
    %193 = vmatprep.subr.mxu0 0.0
    %194 = vmatpush1.msra.mxu0 %v159
    %195 = vmatprep.subr.mxu0 0.0
    %196 = vmatpush1.msra.mxu0 %v160
    %197 = vmatprep.subr.mxu0 0.0
    %198 = vmatpush1.msra.mxu0 %v161
    %199 = vmatprep.subr.mxu0 0.0
    %200 = vmatpush1.msra.mxu0 %v162
    %201 = vmatprep.subr.mxu0 0.0
    %202 = vmatpush1.msra.mxu0 %v163
    %203 = vmatprep.subr.mxu0 0.0
    %204 = vmatpush1.msra.mxu0 0.0
    %205 = vmatprep.subr.mxu0 0.0
    %206 = vmatpush1.msra.mxu0 0.0
    %207 = vmatprep.subr.mxu0 0.0
    %208 = vmatpush1.msra.mxu0 0.0
    %209 = vmatprep.subr.mxu0 0.0
    %210 = vmatpush1.msra.mxu0 0.0
    %211 = vmatprep.subr.mxu0 0.0
    %212 = vmatpush1.msra.mxu0 0.0
    %213 = vmatprep.subr.mxu0 0.0
    %214 = vmatpush1.msra.mxu0 0.0
    %215 = vmatprep.subr.mxu0 0.0
    %216 = vmatpush1.msra.mxu0 0.0
    %217 = vmatprep.subr.mxu0 0.0
    %218 = vmatpush1.msra.mxu0 0.0
    %219 = vmatprep.subr.mxu0 0.0
    %220 = vmatpush1.msra.mxu0 0.0
    %221 = vmatprep.subr.mxu0 0.0
    %222 = vmatpush1.msra.mxu0 0.0
    %223 = vmatprep.subr.mxu0 0.0
    %224 = vmatpush1.msra.mxu0 0.0
    %225 = vmatprep.subr.mxu0 0.0
    %226 = vmatpush1.msra.mxu0 0.0
    %227 = vmatprep.subr.mxu0 0.0
    %228 = vmatpush1.msra.mxu0 0.0
    %229 = vmatprep.subr.mxu0 0.0
    %230 = vmatpush1.msra.mxu0 0.0
    %231 = vmatprep.subr.mxu0 0.0
    %232 = vmatpush1.msra.mxu0 0.0
    %233 = vmatprep.subr.mxu0 0.0
    %234 = vmatpush1.msra.mxu0 0.0
    %235 = vmatprep.mubr.f32.mxu0 0.0
    %236 = vmatmul.mubr.f32.gmra.mrb[0].mxu0 %v147
    %v237 = vpop.f32.mrb[0].mxu0
    %v238 = vadd.f32 %v169, %v237
    %v239 = vpop.f32.mrb[0].mxu0
    %240 = vdwg.mxu0
    %v241 = vmax.f32 %v238, 0.0
    %v242 = vld [vmem:[#allocation5] sm:$0xff]
    %v243 = vld [vmem:[#allocation5 + $0x8] sm:$0xff]
    %v244 = vld [vmem:[#allocation5 + $0x10] sm:$0xff]
    %v245 = vld [vmem:[#allocation5 + $0x18] sm:$0xff]
    %v246 = vld [vmem:[#allocation5 + $0x20] sm:$0xff]
    %v247 = vld [vmem:[#allocation5 + $0x28] sm:$0xff]
    %v248 = vld [vmem:[#allocation5 + $0x30] sm:$0xff]
    %v249 = vld [vmem:[#allocation5 + $0x38] sm:$0xff]
    %v250 = vld [vmem:[#allocation5 + $0x40] sm:$0xff]
    %v251 = vld [vmem:[#allocation5 + $0x48] sm:$0xff]
    %v252 = vld [vmem:[#allocation5 + $0x50] sm:$0xff]
    %v253 = vld [vmem:[#allocation5 + $0x58] sm:$0xff]
    %v254 = vld [vmem:[#allocation5 + $0x60] sm:$0xff]
    %v255 = vld [vmem:[#allocation5 + $0x68] sm:$0xff]
    %v256 = vld [vmem:[#allocation5 + $0x70] sm:$0xff]
    %v257 = vld [vmem:[#allocation5 + $0x78] sm:$0xff]
    %v258 = vld [vmem:[%s6] sm:$0x1]
    %v260 = vlaneseq
    %v261 = vshrl.u32 %v260, 7
    %v262 = vsub.s32 0, %v261
    %v263 = vrot.slane %v258, %v262
    %265 = vmatprep.subr.mxu0 0.0
    %266 = vmatpush1.msra.mxu0 %v242
    %267 = vmatprep.subr.mxu0 0.0
    %268 = vmatpush1.msra.mxu0 %v243
    %269 = vmatprep.subr.mxu0 0.0
    %270 = vmatpush1.msra.mxu0 %v244
    %271 = vmatprep.subr.mxu0 0.0
    %272 = vmatpush1.msra.mxu0 %v245
    %273 = vmatprep.subr.mxu0 0.0
    %274 = vmatpush1.msra.mxu0 %v246
    %275 = vmatprep.subr.mxu0 0.0
    %276 = vmatpush1.msra.mxu0 %v247
    %277 = vmatprep.subr.mxu0 0.0
    %278 = vmatpush1.msra.mxu0 %v248
    %279 = vmatprep.subr.mxu0 0.0
    %280 = vmatpush1.msra.mxu0 %v249
    %281 = vmatprep.subr.mxu0 0.0
    %282 = vmatpush1.msra.mxu0 %v250
    %283 = vmatprep.subr.mxu0 0.0
    %284 = vmatpush1.msra.mxu0 %v251
    %285 = vmatprep.subr.mxu0 0.0
    %286 = vmatpush1.msra.mxu0 %v252
    %287 = vmatprep.subr.mxu0 0.0
    %288 = vmatpush1.msra.mxu0 %v253
    %289 = vmatprep.subr.mxu0 0.0
    %290 = vmatpush1.msra.mxu0 %v254
    %291 = vmatprep.subr.mxu0 0.0
    %292 = vmatpush1.msra.mxu0 %v255
    %293 = vmatprep.subr.mxu0 0.0
    %294 = vmatpush1.msra.mxu0 %v256
    %295 = vmatprep.subr.mxu0 0.0
    %296 = vmatpush1.msra.mxu0 %v257
    %297 = vmatprep.subr.mxu0 0.0
    %298 = vmatpush1.msra.mxu0 0.0
    %299 = vmatprep.subr.mxu0 0.0
    %300 = vmatpush1.msra.mxu0 0.0
    %301 = vmatprep.subr.mxu0 0.0
    %302 = vmatpush1.msra.mxu0 0.0
    %303 = vmatprep.subr.mxu0 0.0
    %304 = vmatpush1.msra.mxu0 0.0
    %305 = vmatprep.subr.mxu0 0.0
    %306 = vmatpush1.msra.mxu0 0.0
    %307 = vmatprep.subr.mxu0 0.0
    %308 = vmatpush1.msra.mxu0 0.0
    %309 = vmatprep.subr.mxu0 0.0
    %310 = vmatpush1.msra.mxu0 0.0
    %311 = vmatprep.subr.mxu0 0.0
    %312 = vmatpush1.msra.mxu0 0.0
    %313 = vmatprep.subr.mxu0 0.0
    %314 = vmatpush1.msra.mxu0 0.0
    %315 = vmatprep.subr.mxu0 0.0
    %316 = vmatpush1.msra.mxu0 0.0
    %317 = vmatprep.subr.mxu0 0.0
    %318 = vmatpush1.msra.mxu0 0.0
    %319 = vmatprep.subr.mxu0 0.0
    %320 = vmatpush1.msra.mxu0 0.0
    %321 = vmatprep.subr.mxu0 0.0
    %322 = vmatpush1.msra.mxu0 0.0
    %323 = vmatprep.subr.mxu0 0.0
    %324 = vmatpush1.msra.mxu0 0.0
    %325 = vmatprep.subr.mxu0 0.0
    %326 = vmatpush1.msra.mxu0 0.0
    %327 = vmatprep.subr.mxu0 0.0
    %328 = vmatpush1.msra.mxu0 0.0
    %329 = vmatprep.mubr.f32.mxu0 0.0
    %330 = vmatmul.mubr.f32.gmra.mrb[0].mxu0 %v241
    %v331 = vpop.f32.mrb[0].mxu0
    %v332 = vadd.f32 %v263, %v331
    %v333 = vpop.f32.mrb[0].mxu0
    %334 = vdwg.mxu0
    %v335 = vmax.f32 %v332, 0.0
    %v336 = vld [vmem:[%s7] sm:$0xff]
    %v337 = vld [vmem:[%s7 + $0x8] sm:$0xff]
    %v338 = vld [vmem:[%s7 + $0x10] sm:$0xff]
    %v339 = vld [vmem:[%s7 + $0x18] sm:$0xff]
    %v340 = vld [vmem:[%s7 + $0x20] sm:$0xff]
    %v341 = vld [vmem:[%s7 + $0x28] sm:$0xff]
    %v342 = vld [vmem:[%s7 + $0x30] sm:$0xff]
    %v343 = vld [vmem:[%s7 + $0x38] sm:$0xff]
    %v344 = vld [vmem:[%s7 + $0x40] sm:$0xff]
    %v345 = vld [vmem:[%s7 + $0x48] sm:$0xff]
    %v346 = vld [vmem:[%s7 + $0x50] sm:$0xff]
    %v347 = vld [vmem:[%s7 + $0x58] sm:$0xff]
    %v348 = vld [vmem:[%s7 + $0x60] sm:$0xff]
    %v349 = vld [vmem:[%s7 + $0x68] sm:$0xff]
    %v350 = vld [vmem:[%s7 + $0x70] sm:$0xff]
    %v351 = vld [vmem:[%s7 + $0x78] sm:$0xff]
    %v352 = vld [vmem:[%s8] sm:$0x1]
    %v354 = vlaneseq
    %v355 = vshrl.u32 %v354, 7
    %v356 = vsub.s32 0, %v355
    %v357 = vrot.slane %v352, %v356
    %359 = vmatprep.subr.mxu0 0.0
    %360 = vmatpush1.msra.mxu0 %v336
    %361 = vmatprep.subr.mxu0 0.0
    %362 = vmatpush1.msra.mxu0 %v337
    %363 = vmatprep.subr.mxu0 0.0
    %364 = vmatpush1.msra.mxu0 %v338
    %365 = vmatprep.subr.mxu0 0.0
    %366 = vmatpush1.msra.mxu0 %v339
    %367 = vmatprep.subr.mxu0 0.0
    %368 = vmatpush1.msra.mxu0 %v340
    %369 = vmatprep.subr.mxu0 0.0
    %370 = vmatpush1.msra.mxu0 %v341
    %371 = vmatprep.subr.mxu0 0.0
    %372 = vmatpush1.msra.mxu0 %v342
    %373 = vmatprep.subr.mxu0 0.0
    %374 = vmatpush1.msra.mxu0 %v343
    %375 = vmatprep.subr.mxu0 0.0
    %376 = vmatpush1.msra.mxu0 %v344
    %377 = vmatprep.subr.mxu0 0.0
    %378 = vmatpush1.msra.mxu0 %v345
    %379 = vmatprep.subr.mxu0 0.0
    %380 = vmatpush1.msra.mxu0 %v346
    %381 = vmatprep.subr.mxu0 0.0
    %382 = vmatpush1.msra.mxu0 %v347
    %383 = vmatprep.subr.mxu0 0.0
    %384 = vmatpush1.msra.mxu0 %v348
    %385 = vmatprep.subr.mxu0 0.0
    %386 = vmatpush1.msra.mxu0 %v349
    %387 = vmatprep.subr.mxu0 0.0
    %388 = vmatpush1.msra.mxu0 %v350
    %389 = vmatprep.subr.mxu0 0.0
    %390 = vmatpush1.msra.mxu0 %v351
    %391 = vmatprep.subr.mxu0 0.0
    %392 = vmatpush1.msra.mxu0 0.0
    %393 = vmatprep.subr.mxu0 0.0
    %394 = vmatpush1.msra.mxu0 0.0
    %395 = vmatprep.subr.mxu0 0.0
    %396 = vmatpush1.msra.mxu0 0.0
    %397 = vmatprep.subr.mxu0 0.0
    %398 = vmatpush1.msra.mxu0 0.0
    %399 = vmatprep.subr.mxu0 0.0
    %400 = vmatpush1.msra.mxu0 0.0
    %401 = vmatprep.subr.mxu0 0.0
    %402 = vmatpush1.msra.mxu0 0.0
    %403 = vmatprep.subr.mxu0 0.0
    %404 = vmatpush1.msra.mxu0 0.0
    %405 = vmatprep.subr.mxu0 0.0
    %406 = vmatpush1.msra.mxu0 0.0
    %407 = vmatprep.subr.mxu0 0.0
    %408 = vmatpush1.msra.mxu0 0.0
    %409 = vmatprep.subr.mxu0 0.0
    %410 = vmatpush1.msra.mxu0 0.0
    %411 = vmatprep.subr.mxu0 0.0
    %412 = vmatpush1.msra.mxu0 0.0
    %413 = vmatprep.subr.mxu0 0.0
    %414 = vmatpush1.msra.mxu0 0.0
    %415 = vmatprep.subr.mxu0 0.0
    %416 = vmatpush1.msra.mxu0 0.0
    %417 = vmatprep.subr.mxu0 0.0
    %418 = vmatpush1.msra.mxu0 0.0
    %419 = vmatprep.subr.mxu0 0.0
    %420 = vmatpush1.msra.mxu0 0.0
    %421 = vmatprep.subr.mxu0 0.0
    %422 = vmatpush1.msra.mxu0 0.0
    %423 = vmatprep.mubr.f32.mxu0 0.0
    %424 = vmatmul.mubr.f32.gmra.mrb[0].mxu0 %v335
    %v425 = vpop.f32.mrb[0].mxu0
    %v426 = vadd.f32 %v357, %v425
    %v427 = vpop.f32.mrb[0].mxu0
    %428 = vdwg.mxu0
    %vm429 = vcmask 64512
    %430 = vst.msk [vmem:[#allocation7] sm:$0xff] %vm429, %v426
    // Predicated region
    $region46: #{tpu_custom_call.1} parent=1 // pred_check
      _
    $region47: #{tpu_custom_call.1} parent=1 // pred_check_branch
      %432 = sbr.rel (0) target = $region49
    $region48: #{tpu_custom_call.1} parent=1 // pred_region
      %s434 = ssub.s32 128, 128
      %435 = vsyncadd [#allocation4], %s434
      %s437 = sshll.u32 [#allocation7], 4
      %s438 = int_to_ptr.vmem [resolvable:$true] %s437
      %440 = dma.vmem_to_hbm [thread:$0]  %s438, 128, %s9, [#allocation4]
    $region49: #{tpu_custom_call.1} parent=1 // pred_fallthru
      _
    // Predicated region
    $region50: #{tpu_custom_call.1} parent=1 // pred_check
      _
    $region51: #{tpu_custom_call.1} parent=1 // pred_check_branch
      %442 = sbr.rel (0) target = $region53
    $region52: #{tpu_custom_call.1} parent=1 // pred_region
      %443 = dma.done [#allocation4], 128
    $region53: #{tpu_custom_call.1} parent=1 // pred_fallthru
      _
    %444 = vsyncpa [#allocation3], 1
    %445 = vsyncpa [#allocation6], 1
    %446 = vsyncpa [#allocation4], 1

</llo_original>
